<compile_context>
chip_gen: v7x
topology: tpu7x:2x2x1
jax: 0.10.0
libtpu: 0.0.40
codegen_flags: <defaults>
</compile_context>

<pallas_src>
import jax
import jax.numpy as jnp
from jax.experimental import pallas as pl
from jax.experimental.pallas import tpu as pltpu

_MiB = 1024 * 1024


# ----------------------------- Pallas kernel --------------------------------
def _readout_matmul_kernel(x_ref, b_ref, bias_ref, o_ref):
    # x_ref    : (tm, tk)  compute dtype (bf16 or f32)
    # b_ref    : (tk, tn)  compute dtype
    # bias_ref : (1, tn)   f32
    # o_ref    : (tm, tn)  f32 — block index is independent of the K axis, so the
    #            output block stays resident in VMEM across all K steps and is
    #            used directly as the accumulator; bias is its init value.
    @pl.when(pl.program_id(2) == 0)
    def _():
        o_ref[...] = jnp.broadcast_to(bias_ref[...], o_ref.shape)

    o_ref[...] += jnp.dot(x_ref[...], b_ref[...],
                          preferred_element_type=jnp.float32)


# ------------------- parameter-only fused readout matrix --------------------
def build_readout_matrix(grid_pts, features, spatial_shape, pool_steps, c):
    """Fold avg-pool pyramid + bilinear grid_sample + feature weights into B.

    grid_pts : (outdims, 2), clamped to [-1, 1]; grid[...,0] -> h axis (last),
               grid[...,1] -> w axis (second-to-last), align_corners=True.
    features : (m*c, outdims) with m = pool_steps + 1, level-major channel order
               (matches torch.cat(pools, dim=1)).
    Returns B: (c*w*h, outdims) f32 such that
               y[frame] = x[frame].reshape(c*w*h) @ B
    reproduces the pooled / interpolated / feature-weighted readout.
    """
    w, h = spatial_shape
    outdims = grid_pts.shape[0]
    gx = grid_pts[:, 0]
    gy = grid_pts[:, 1]

    B = jnp.zeros((c, w * h, outdims), dtype=jnp.float32)

    wp, hp = w, h
    scale = 1  # 2**p : side of the original-resolution block behind one pooled pixel
    for p in range(pool_steps + 1):
        if p > 0:
            # AvgPool2d(kernel=2, stride=2), floor mode.
            wp, hp = wp // 2, hp // 2
            scale *= 2

        # Bilinear corner indices / weights on the (wp, hp) pooled map,
        # align_corners=True: pix = (coord + 1)/2 * (size - 1).
        ix = (gx + 1.0) * 0.5 * (hp - 1)
        iy = (gy + 1.0) * 0.5 * (wp - 1)
        x0 = jnp.floor(ix)
        fx = ix - x0
        y0 = jnp.floor(iy)
        fy = iy - y0
        x0i = jnp.clip(x0.astype(jnp.int32), 0, hp - 1)
        x1i = jnp.clip(x0i + 1, 0, hp - 1)
        y0i = jnp.clip(y0.astype(jnp.int32), 0, wp - 1)
        y1i = jnp.clip(y0i + 1, 0, wp - 1)

        cy = jnp.stack([y0i, y0i, y1i, y1i], axis=0)                    # (4, od)
        cx = jnp.stack([x0i, x1i, x0i, x1i], axis=0)                    # (4, od)
        cw = jnp.stack([(1 - fy) * (1 - fx), (1 - fy) * fx,
                        fy * (1 - fx), fy * fx], axis=0)                # (4, od)

        # Each pooled pixel (Y, X) is the mean of the scale x scale block
        # [Y*scale, (Y+1)*scale) x [X*scale, (X+1)*scale) of the original frame
        # — spread each corner weight uniformly over that block.
        dy = jnp.arange(scale, dtype=jnp.int32)
        dx = jnp.arange(scale, dtype=jnp.int32)
        oy = cy[:, :, None, None] * scale + dy[None, None, :, None]     # (4, od, s, 1)
        ox = cx[:, :, None, None] * scale + dx[None, None, None, :]     # (4, od, 1, s)
        rows = (oy * h + ox).reshape(-1)                                # (4*od*s*s,)
        vals = jnp.broadcast_to(cw[:, :, None, None] / float(scale * scale),
                                (4, outdims, scale, scale)).reshape(-1)
        cols = jnp.broadcast_to(jnp.arange(outdims, dtype=jnp.int32)[None, :, None, None],
                                (4, outdims, scale, scale)).reshape(-1)

        # Spatial interpolation map for this level (shared by all channels).
        S = jnp.zeros((w * h, outdims), jnp.float32).at[rows, cols].add(vals)

        # Fuse the per-(level, channel, neuron) feature weight into the columns.
        feat_p = features[p * c:(p + 1) * c, :]                         # (c, od)
        B = B + S[None, :, :] * feat_p[:, None, :]

    return B.reshape(c * w * h, outdims)


# ----------------------------- config helpers --------------------------------
def _round_up(a, b):
    return (a + b - 1) // b * b


def _largest_tile(dim_padded, unit, cap):
    """Largest multiple-of-`unit` divisor of `dim_padded` that is <= cap."""
    q = max(1, dim_padded // unit)
    max_mult = max(1, cap // unit)
    best = 1
    d = 1
    while d <= q:
        if q % d == 0 and d <= max_mult:
            best = d
        d += 1
    return best * unit


def _chip_info():
    """Best-effort chip detection; safe fallbacks if queries are unavailable."""
    kind = ""
    try:
        kind = jax.devices()[0].device_kind.lower()
    except Exception:
        pass
    is_v5e = ("v5 lite" in kind) or ("v5e" in kind) or ("v5litepod" in kind)
    is_v7 = ("v7" in kind) or ("tpu7" in kind) or ("tpu 7" in kind)
    vmem_cap = None
    try:
        vmem_cap = int(pltpu.get_tpu_info().vmem_capacity_bytes)
    except Exception:
        vmem_cap = None
    if vmem_cap is None or vmem_cap <= 0:
        vmem_cap = (64 if is_v7 else 128) * _MiB
    return kind, vmem_cap, is_v5e, is_v7


def _vmem_footprint(tm, tn, tk, itemsize, b_buffers):
    return (2 * tm * tk * itemsize                     # x tile, double-buffered
            + max(2, b_buffers) * tk * tn * itemsize   # B tile buffers
            + 2 * tm * tn * 4                          # f32 output/accumulator block
            + 2 * tn * 4)                              # bias


def _make_b_spec(tk, tn, b_buffers):
    idx = lambda i, j, k: (k, j)
    if b_buffers and b_buffers > 2:
        try:
            # Deeper buffering of the B stream (helps hide v5e's slower HBM).
            return pl.BlockSpec((tk, tn), idx, pipeline_mode=pl.Buffered(int(b_buffers)))
        except Exception:
            pass
    return pl.BlockSpec((tk, tn), idx)


# ------------------------------- wrapper -------------------------------------
def spatial_transformer_pooled3d_pallas(
    x, grid_param, features_param, bias, pool_steps,
    compute_dtype=jnp.bfloat16, tm=None, tn=None, tk=None,
    vmem_limit_bytes=None, b_buffer_count=None,
):
    """Eval-mode forward of SpatialTransformerPooled3d.

    x              : (N, c, t, w, h) f32
    grid_param     : (1, outdims, 1, 2)
    features_param : (1, (pool_steps+1)*c, 1, outdims)
    bias           : (outdims,)
    Returns (N, t, outdims) f32.
    """
    N, c, t, w, h = x.shape
    outdims = features_param.shape[-1]
    m = pool_steps + 1

    grid_pts = jnp.clip(grid_param.reshape(outdims, 2), -1.0, 1.0)
    features = features_param.reshape(m * c, outdims)

    # Parameter-only fused matrix (pool pyramid + bilinear + feature scale).
    B = build_readout_matrix(grid_pts, features, (w, h), pool_steps, c)   # (K, od) f32

    rows = N * t
    K = c * w * h

    itemsize = jnp.dtype(compute_dtype).itemsize
    row_unit = 8 if itemsize >= 4 else (16 if itemsize == 2 else 32)

    kind, vmem_cap, is_v5e, is_v7 = _chip_info()
    if vmem_limit_bytes is None:
        # 64 MiB scoped on 128 MiB chips (v5e/v6e); ~48 MiB with headroom on v7x.
        if vmem_cap >= 128 * _MiB:
            vmem_limit_bytes = 64 * _MiB
        else:
            vmem_limit_bytes = min(48 * _MiB, max(16 * _MiB, vmem_cap - 16 * _MiB))
    if b_buffer_count is None:
        b_buffer_count = 3 if is_v5e else 2

    # --- padded problem sizes: (sublane, 128) granularity only ------------------
    rows_p = _round_up(rows, row_unit)
    K_p = _round_up(K, 128)
    od_p = _round_up(outdims, 128)
    # Explicit tile overrides additionally require tile-multiple padding.
    if tm is not None:
        rows_p = _round_up(rows_p, tm)
    if tk is not None:
        K_p = _round_up(K_p, tk)
    if tn is not None:
        od_p = _round_up(od_p, tn)

    # --- tile derivation: divisors of the padded sizes, bounded by caps + VMEM ---
    auto_tm, auto_tn, auto_tk = tm is None, tn is None, tk is None
    if auto_tm:
        tm = _largest_tile(rows_p, row_unit, 512 if rows_p >= 512 else 256)
    if auto_tn:
        tn = _largest_tile(od_p, 128, 512)
    if auto_tk:
        tk = _largest_tile(K_p, 128, 4096 if itemsize <= 2 else 2048)

    budget = int(vmem_limit_bytes * 0.75)

    def _fits():
        return _vmem_footprint(tm, tn, tk, itemsize, b_buffer_count) <= budget

    while auto_tk and not _fits() and tk > 128:
        tk = _largest_tile(K_p, 128, max(128, tk // 2))
    while auto_tn and not _fits() and tn > 128:
        tn = _largest_tile(od_p, 128, max(128, tn // 2))
    while auto_tm and not _fits() and tm > row_unit:
        tm = _largest_tile(rows_p, row_unit, max(row_unit, tm // 2))

    # v7x: make sure the 'parallel' axes have >= 2 tiles so both TensorCores work.
    if is_v7 and (rows_p // tm) * (od_p // tn) < 2:
        if auto_tn:
            tn2 = _largest_tile(od_p, 128, max(128, tn // 2))
            if tn2 < tn and od_p // tn2 >= 2:
                tn = tn2
        if (rows_p // tm) * (od_p // tn) < 2 and auto_tm:
            tm2 = _largest_tile(rows_p, row_unit, max(row_unit, tm // 2))
            if tm2 < tm and rows_p // tm2 >= 2:
                tm = tm2

    # --- operand preparation: single fusable pass per array ---------------------
    # Frame-flatten in the same layout as PyTorch's x.transpose(2,1).view(-1,c,w,h):
    # cast + transpose + (optional) pad form one producer chain XLA can fuse;
    # no zeros+update-slice round trips over x.
    x_flat = jnp.transpose(x.astype(compute_dtype), (0, 2, 1, 3, 4)).reshape(rows, K)
    if (rows_p, K_p) != (rows, K):
        x_flat = jnp.pad(x_flat, ((0, rows_p - rows), (0, K_p - K)))

    B_c = B.astype(compute_dtype)
    if (K_p, od_p) != (K, outdims):
        B_c = jnp.pad(B_c, ((0, K_p - K), (0, od_p - outdims)))

    bias_p = bias.astype(jnp.float32).reshape(1, outdims)
    if od_p != outdims:
        bias_p = jnp.pad(bias_p, ((0, 0), (0, od_p - outdims)))

    grid = (rows_p // tm, od_p // tn, K_p // tk)

    cost = pl.CostEstimate(
        flops=2 * rows_p * K_p * od_p,
        transcendentals=0,
        bytes_accessed=(rows_p * K_p * itemsize + K_p * od_p * itemsize
                        + od_p * 4 + rows_p * od_p * 4),
    )

    out_pad = pl.pallas_call(
        _readout_matmul_kernel,
        out_shape=jax.ShapeDtypeStruct((rows_p, od_p), jnp.float32),
        grid_spec=pltpu.PrefetchScalarGridSpec(
            num_scalar_prefetch=0,
            grid=grid,
            in_specs=[
                pl.BlockSpec((tm, tk), lambda i, j, k: (i, k)),   # x tile
                _make_b_spec(tk, tn, b_buffer_count),             # B tile
                pl.BlockSpec((1, tn), lambda i, j, k: (0, j)),    # bias tile
            ],
            out_specs=pl.BlockSpec((tm, tn), lambda i, j, k: (i, j)),
        ),
        compiler_params=pltpu.CompilerParams(
            dimension_semantics=("parallel", "parallel", "arbitrary"),
            vmem_limit_bytes=int(vmem_limit_bytes),
        ),
        cost_estimate=cost,
    )(x_flat, B_c, bias_p)

    return out_pad[:rows, :outdims].reshape(N, t, outdims)


# ------------------------- pure-JAX reference --------------------------------
def _avg_pool2x2(z):
    NT, c, W, H = z.shape
    Wc, Hc = (W // 2) * 2, (H // 2) * 2
    z = z[:, :, :Wc, :Hc].reshape(NT, c, Wc // 2, 2, Hc // 2, 2)
    return z.mean(axis=(3, 5))


def _bilinear_sample(z, grid_pts):
    # z: (NT, c, W, H); grid[...,0] -> H axis, grid[...,1] -> W axis (align_corners=True)
    NT, c, W, H = z.shape
    gx, gy = grid_pts[:, 0], grid_pts[:, 1]
    ix = (gx + 1.0) * 0.5 * (H - 1)
    iy = (gy + 1.0) * 0.5 * (W - 1)
    x0 = jnp.floor(ix)
    fx = ix - x0
    y0 = jnp.floor(iy)
    fy = iy - y0
    x0i = jnp.clip(x0.astype(jnp.int32), 0, H - 1)
    x1i = jnp.clip(x0i + 1, 0, H - 1)
    y0i = jnp.clip(y0.astype(jnp.int32), 0, W - 1)
    y1i = jnp.clip(y0i + 1, 0, W - 1)
    v00 = z[:, :, y0i, x0i]
    v01 = z[:, :, y0i, x1i]
    v10 = z[:, :, y1i, x0i]
    v11 = z[:, :, y1i, x1i]
    return (v00 * (1 - fy) * (1 - fx) + v01 * (1 - fy) * fx
            + v10 * fy * (1 - fx) + v11 * fy * fx)        # (NT, c, outdims)


def reference_forward(x, grid_param, features_param, bias, pool_steps):
    """Direct transcription of the PyTorch forward (pool -> grid_sample -> scale)."""
    N, c, t, w, h = x.shape
    outdims = features_param.shape[-1]
    m = pool_steps + 1
    grid_pts = jnp.clip(grid_param.reshape(outdims, 2), -1.0, 1.0)
    features = features_param.reshape(m * c, outdims)

    z = jnp.transpose(x, (0, 2, 1, 3, 4)).reshape(N * t, c, w, h)
    pools = []
    for p in range(m):
        if p > 0:
            z = _avg_pool2x2(z)
        pools.append(_bilinear_sample(z, grid_pts))
    y = jnp.concatenate(pools, axis=1)                       # (NT, m*c, od)
    y = jnp.sum(y * features[None, :, :], axis=1)            # (NT, od)
    return y.reshape(N, t, outdims) + bias[None, None, :]


# ---------------------------------- main -------------------------------------
if __name__ == "__main__":
    key = jax.random.PRNGKey(0)
    k_x, k_grid, k_feat, k_bias = jax.random.split(key, 4)

    # Module config (small): in_shape = (c, t, w, h)
    c, t, w, h = 4, 8, 16, 16
    outdims = 32
    pool_steps = 1
    batch = 2
    init_range = 0.05
    m = pool_steps + 1

    # Input movie (N, c, t, w, h).
    x = jax.random.normal(k_x, (batch, c, t, w, h), dtype=jnp.float32)

    # Parameters consistent with SpatialTransformerPooled3d.initialize()
    # (features nominally 1/c; small perturbations so the channel/level
    # weighting is actually exercised by the correctness check).
    grid_param = jax.random.uniform(
        k_grid, (1, outdims, 1, 2),
        minval=-init_range, maxval=init_range, dtype=jnp.float32)
    features_param = (jnp.full((1, m * c, 1, outdims), 1.0 / c, dtype=jnp.float32)
                      + 0.05 * jax.random.normal(k_feat, (1, m * c, 1, outdims),
                                                 dtype=jnp.float32))
    bias = 0.1 * jax.random.normal(k_bias, (outdims,), dtype=jnp.float32)

    ref = reference_forward(x, grid_param, features_param, bias, pool_steps)

    # f32 run with forced small tiles: 2 row tiles x 1 outdims tile x 4 K steps.
    # Exercises the bias-init / accumulate-into-o_ref path across multiple steps.
    out_f32 = spatial_transformer_pooled3d_pallas(
        x, grid_param, features_param, bias, pool_steps,
        compute_dtype=jnp.float32, tm=8, tn=128, tk=256)
    out_f32 = jax.block_until_ready(out_f32)
    assert out_f32.shape == (batch, t, outdims)
    assert jnp.allclose(out_f32, ref, atol=1e-4, rtol=1e-4), "f32 mismatch vs reference"

    # Default path: bf16 operands (MXU-native, half the HBM traffic), f32
    # accumulation + bias, tiles auto-derived from the running chip's VMEM.
    out_bf16 = spatial_transformer_pooled3d_pallas(
        x, grid_param, features_param, bias, pool_steps)
    out_bf16 = jax.block_until_ready(out_bf16)
    assert out_bf16.shape == (batch, t, outdims)
    assert jnp.allclose(out_bf16, ref, atol=5e-2, rtol=5e-2), "bf16 mismatch vs reference"

    print("KERNEL_OK")
</pallas_src>

<mosaic_0001>
module attributes {stable_mosaic.version = 11 : i64} {
  func.func @_readout_matmul_kernel(%arg0: i32, %arg1: i32, %arg2: i32, %arg3: memref<8x256xf32, #tpu.memory_space<vmem>>, %arg4: memref<256x128xf32, #tpu.memory_space<vmem>>, %arg5: memref<1x128xf32, #tpu.memory_space<vmem>>, %arg6: memref<8x128xf32, #tpu.memory_space<vmem>>) attributes {dimension_semantics = [#tpu.dimension_semantics<parallel>, #tpu.dimension_semantics<parallel>, #tpu.dimension_semantics<arbitrary>], iteration_bounds = array<i64: 2, 1, 4>, scalar_prefetch = 0 : i64, scratch_operands = 0 : i64, tpu.core_type = #tpu.core_type<tc>, window_params = [{transform_indices = @transform_0, window_bounds = array<i64: 8, 256>}, {transform_indices = @transform_1, window_bounds = array<i64: 256, 128>}, {transform_indices = @transform_2, window_bounds = array<i64: 1, 128>}, {transform_indices = @transform_3, window_bounds = array<i64: 8, 128>}]} {
    %c0_i32 = arith.constant 0 : i32
    %0 = arith.cmpi eq, %arg2, %c0_i32 : i32
    %1 = arith.extui %0 : i1 to i32
    %c0_i32_0 = arith.constant 0 : i32
    %2 = arith.cmpi ne, %1, %c0_i32_0 : i32
    scf.if %2 {
      %c0_8 = arith.constant 0 : index
      %c0_9 = arith.constant 0 : index
      %9 = vector.load %arg5[%c0_8, %c0_9] : memref<1x128xf32, #tpu.memory_space<vmem>>, vector<1x128xf32>
      %10 = vector.shape_cast %9 : vector<1x128xf32> to vector<1x128xf32>
      %11 = vector.broadcast %10 : vector<1x128xf32> to vector<8x128xf32>
      %c0_10 = arith.constant 0 : index
      %c0_11 = arith.constant 0 : index
      %12 = vector.load %arg6[%c0_10, %c0_11] : memref<8x128xf32, #tpu.memory_space<vmem>>, vector<8x128xf32>
      tpu.vector_store %arg6[%c0_10, %c0_11], %11 {strides = array<i32>} : memref<8x128xf32, #tpu.memory_space<vmem>>, vector<8x128xf32>,
    } else {
    }
    %c0 = arith.constant 0 : index
    %c0_1 = arith.constant 0 : index
    %3 = vector.load %arg6[%c0, %c0_1] : memref<8x128xf32, #tpu.memory_space<vmem>>, vector<8x128xf32>
    %c0_2 = arith.constant 0 : index
    %c0_3 = arith.constant 0 : index
    %4 = vector.load %arg3[%c0_2, %c0_3] : memref<8x256xf32, #tpu.memory_space<vmem>>, vector<8x256xf32>
    %c0_4 = arith.constant 0 : index
    %c0_5 = arith.constant 0 : index
    %5 = vector.load %arg4[%c0_4, %c0_5] : memref<256x128xf32, #tpu.memory_space<vmem>>, vector<256x128xf32>
    %cst = arith.constant dense<0.000000e+00> : vector<8x128xf32>
    %6 = tpu.matmul %4, %5, %cst {dimension_numbers = #tpu.dot_dimension_numbers<[1], [0], [0], [1], [0, 0, 1, 1], [], []>} : vector<8x256xf32>, vector<256x128xf32>, vector<8x128xf32> -> vector<8x128xf32>
    %7 = arith.addf %3, %6 : vector<8x128xf32>
    %c0_6 = arith.constant 0 : index
    %c0_7 = arith.constant 0 : index
    %8 = vector.load %arg6[%c0_6, %c0_7] : memref<8x128xf32, #tpu.memory_space<vmem>>, vector<8x128xf32>
    tpu.vector_store %arg6[%c0_6, %c0_7], %7 {strides = array<i32>} : memref<8x128xf32, #tpu.memory_space<vmem>>, vector<8x128xf32>,
    return
  }
  func.func @transform_0(%arg0: i32, %arg1: i32, %arg2: i32) -> (i32, i32) {
    %c0_i32 = arith.constant 0 : i32
    return %arg0, %arg2 : i32, i32
  }
  func.func @transform_1(%arg0: i32, %arg1: i32, %arg2: i32) -> (i32, i32) {
    %c0_i32 = arith.constant 0 : i32
    return %arg2, %arg1 : i32, i32
  }
  func.func @transform_2(%arg0: i32, %arg1: i32, %arg2: i32) -> (i32, i32) {
    %c0_i32 = arith.constant 0 : i32
    %c0_i32_0 = arith.constant 0 : i32
    return %c0_i32, %arg1 : i32, i32
  }
  func.func @transform_3(%arg0: i32, %arg1: i32, %arg2: i32) -> (i32, i32) {
    %c0_i32 = arith.constant 0 : i32
    return %arg0, %arg1 : i32, i32
  }
}

</mosaic_0001>

<llo_original>
// kernel: tpu_custom_call.1
$region0: #{tpu_custom_call.1}
  #allocation0 [shape = 'u32[]', space=smem, size = 0x4, offset = 0x4, fixed_abs, tag = 'smem constant byte address 0x4 - core index']
  #allocation1 [shape = 'u32[144,128]{1,0:T(1,128)}', space=vmem, size = 0x12000, scoped, tag = 'internal scratch']
  %s0 = inlined_call_operand.hbm [shape: f32[16,1024], index: 0, kind: input, shape index: {}]
  %s1 = inlined_call_operand.hbm [shape: f32[1024,128], index: 1, kind: input, shape index: {}]
  %s2 = inlined_call_operand.hbm [shape: f32[1,128], index: 2, kind: input, shape index: {}]
  %s3 = inlined_call_operand.hbm [shape: f32[16,128], index: 3, kind: output, shape index: {}]
  %s4 = sld [smem:[#allocation0]]
  $region61: #{tpu_custom_call.1} parent=0
    _
  %s6 = ssub.s32 1, %s4
  %s7 = scalar_select 0, %s6, %s4
  $region1: #{tpu_custom_call.1} parent=0
    #allocation2 [shape = 'u8[16384]{0}', space=vmem, size = 0x4000, scoped, tag = 'input window, operand 0']
    #allocation3 [shape = 's32[2]{0}', space=sflag, size = 0x8, scoped, tag = 'scoped memory for tpu_custom_call.1']
    #allocation4 [shape = 's32[2]{0}', space=sflag, size = 0x8, scoped, tag = 'scoped memory for tpu_custom_call.1']
    #allocation5 [shape = 'u8[262144]{0}', space=vmem, size = 0x40000, scoped, tag = 'input window, operand 1']
    #allocation6 [shape = 's32[2]{0}', space=sflag, size = 0x8, scoped, tag = 'scoped memory for tpu_custom_call.1']
    #allocation7 [shape = 'u8[512]{0}', space=vmem, size = 0x400, scoped, tag = 'input window, operand 2, single buffered']
    #allocation8 [shape = 'u8[8192]{0}', space=vmem, size = 0x2000, scoped, tag = 'output window, operand 0']
    %8 = vsyncpa [#allocation3], 0
    %s9 = scalar_lea.sflag [#allocation3], 1
    %10 = vsyncpa %s9, 0
    %11 = vsyncpa [#allocation6], 0
    %s12 = scalar_lea.sflag [#allocation6], 1
    %13 = vsyncpa %s12, 0
    %14 = vsyncpa [#allocation4], 0
    %s15 = scalar_lea.sflag [#allocation4], 1
    %16 = vsyncpa %s15, 0
    loop: start=0, step=1, limit=10
    $region2: #{tpu_custom_call.1} parent=1 // loop_pre_header
      _
    $region3: #{tpu_custom_call.1} parent=1 // loop_header
      %s18 = sphi 0, %s22
      %p19 = scmp.ge.s32.totalorder %s18, 10
      %s25 = sphi 0, %s44
      %s26 = sphi 0, %s40
      %s27 = sphi 0, %s36
      %s28 = sphi 0, %s25
      %s29 = sphi 0, %s26
      %s30 = sphi 0, %s27
      %s31 = sphi 0, %s28
      %s32 = sphi 0, %s29
      %s33 = sphi 0, %s30
      %s49 = sphi 0, %s51
      %s52 = sphi 0, %s49
      %s53 = sphi 0, %s52
      %s69 = sphi 0, %s53
      %s77 = sphi 0, %s79
      %s80 = sphi 0, %s77
      %s81 = sphi 0, %s80
      %s97 = sphi 0, %s81
      %s103 = sphi 0, %s105
      %s106 = sphi 0, %s103
      %s107 = sphi 0, %s106
      %s123 = sphi 0, %s107
      %s131 = sphi 0, %s133
      %s134 = sphi 0, %s131
      %s135 = sphi 0, %s134
      %s151 = sphi 0, %s135
    $region4: #{tpu_custom_call.1} parent=1 // loop_header_branch
      %21 = sbr.rel (%p19) target = $region8
    $region5: #{tpu_custom_call.1} parent=1 // loop_body
      %s23 = ssub.s32 %s18, 1
      %s24 = ssub.s32 %s18, 2
      %s34 = sadd.s32 1, %s27
      %p35 = scmp.ge.s32.totalorder %s34, 4
      %s36 = scalar_select %p35, 0, %s34
      %s37 = sadd.s32 1, %s26
      %s38 = scalar_select %p35, %s37, %s26
      %p39 = scmp.ge.s32.totalorder %s38, 1
      %s40 = scalar_select %p39, 0, %s38
      %s41 = sadd.s32 1, %s25
      %s42 = scalar_select %p39, %s41, %s25
      %p43 = scmp.ge.s32.totalorder %s42, 2
      %s44 = scalar_select %p43, 0, %s42
      %s45 = ssub.s32 %s25, %s44
      %s46 = ssub.s32 %s27, %s36
      %s47 = sor.u32 %s45, %s46
      %p48 = scmp.eq.s32.totalorder %s47, 0
      %s50 = sadd.s32 %s49, 1
      %s51 = scalar_select %p48, %s49, %s50
      %p54 = pneg %p48
      %p55 = scmp.eq.s32.totalorder %s18, 7
      %p56 = por %p54, %p55
      %p57 = scmp.ne.s32.totalorder %s49, %s52
      %p58 = scmp.eq.s32.totalorder %s18, 0
      %p59 = por %p57, %p58
      %p60 = scmp.ne.s32.totalorder %s49, %s52
      %p61 = scmp.eq.s32.totalorder %s23, 7
      %p62 = por %p60, %p61
      %p63 = scmp.ne.s32.totalorder %s52, %s53
      %p64 = scmp.eq.s32.totalorder %s23, 0
      %p65 = por %p63, %p64
      %p66 = scmp.ne.s32.totalorder %s52, %s53
      %p67 = scmp.eq.s32.totalorder %s24, 7
      %p68 = por %p66, %p67
      %p70 = scmp.ne.s32.totalorder %s53, %s69
      %p71 = scmp.eq.s32.totalorder %s24, 0
      %p72 = por %p70, %p71
      %s73 = ssub.s32 %s27, %s36
      %s74 = ssub.s32 %s26, %s40
      %s75 = sor.u32 %s73, %s74
      %p76 = scmp.eq.s32.totalorder %s75, 0
      %s78 = sadd.s32 %s77, 1
      %s79 = scalar_select %p76, %s77, %s78
      %p82 = pneg %p76
      %p83 = scmp.eq.s32.totalorder %s18, 7
      %p84 = por %p82, %p83
      %p85 = scmp.ne.s32.totalorder %s77, %s80
      %p86 = scmp.eq.s32.totalorder %s18, 0
      %p87 = por %p85, %p86
      %p88 = scmp.ne.s32.totalorder %s77, %s80
      %p89 = scmp.eq.s32.totalorder %s23, 7
      %p90 = por %p88, %p89
      %p91 = scmp.ne.s32.totalorder %s80, %s81
      %p92 = scmp.eq.s32.totalorder %s23, 0
      %p93 = por %p91, %p92
      %p94 = scmp.ne.s32.totalorder %s80, %s81
      %p95 = scmp.eq.s32.totalorder %s24, 7
      %p96 = por %p94, %p95
      %p98 = scmp.ne.s32.totalorder %s81, %s97
      %p99 = scmp.eq.s32.totalorder %s24, 0
      %p100 = por %p98, %p99
      %s101 = ssub.s32 %s26, %s40
      %p102 = scmp.eq.s32.totalorder %s101, 0
      %s104 = sadd.s32 %s103, 1
      %s105 = scalar_select %p102, %s103, %s104
      %p108 = pneg %p102
      %p109 = scmp.eq.s32.totalorder %s18, 7
      %p110 = por %p108, %p109
      %p111 = scmp.ne.s32.totalorder %s103, %s106
      %p112 = scmp.eq.s32.totalorder %s18, 0
      %p113 = por %p111, %p112
      %p114 = scmp.ne.s32.totalorder %s103, %s106
      %p115 = scmp.eq.s32.totalorder %s23, 7
      %p116 = por %p114, %p115
      %p117 = scmp.ne.s32.totalorder %s106, %s107
      %p118 = scmp.eq.s32.totalorder %s23, 0
      %p119 = por %p117, %p118
      %p120 = scmp.ne.s32.totalorder %s106, %s107
      %p121 = scmp.eq.s32.totalorder %s24, 7
      %p122 = por %p120, %p121
      %p124 = scmp.ne.s32.totalorder %s107, %s123
      %p125 = scmp.eq.s32.totalorder %s24, 0
      %p126 = por %p124, %p125
      %s127 = ssub.s32 %s25, %s44
      %s128 = ssub.s32 %s26, %s40
      %s129 = sor.u32 %s127, %s128
      %p130 = scmp.eq.s32.totalorder %s129, 0
      %s132 = sadd.s32 %s131, 1
      %s133 = scalar_select %p130, %s131, %s132
      %p136 = pneg %p130
      %p137 = scmp.eq.s32.totalorder %s18, 7
      %p138 = por %p136, %p137
      %p139 = scmp.ne.s32.totalorder %s131, %s134
      %p140 = scmp.eq.s32.totalorder %s18, 0
      %p141 = por %p139, %p140
      %p142 = scmp.ne.s32.totalorder %s131, %s134
      %p143 = scmp.eq.s32.totalorder %s23, 7
      %p144 = por %p142, %p143
      %p145 = scmp.ne.s32.totalorder %s134, %s135
      %p146 = scmp.eq.s32.totalorder %s23, 0
      %p147 = por %p145, %p146
      %p148 = scmp.ne.s32.totalorder %s134, %s135
      %p149 = scmp.eq.s32.totalorder %s24, 7
      %p150 = por %p148, %p149
      %p152 = scmp.ne.s32.totalorder %s135, %s151
      %p153 = scmp.eq.s32.totalorder %s24, 0
      %p154 = por %p152, %p153
      %p155 = scmp.le.s32.totalorder 1, %s18
      %p156 = scmp.lt.s32.totalorder %s18, 9
      %p157 = pnand %p155, %p156
      %p158 = pneg %p157
      // Predicated region
      $region9: #{tpu_custom_call.1} parent=5 // pred_check
        _
      $region10: #{tpu_custom_call.1} parent=5 // pred_check_branch
        %160 = sbr.rel (%p157) target = $region12
      $region11: #{tpu_custom_call.1} parent=5 // pred_region
        %s161 = ssub.s32 %s18, 1
        // Predicated region
        $region13: #{tpu_custom_call.1} parent=11 // pred_check
          %p162 = pneg %p119
        $region14: #{tpu_custom_call.1} parent=11 // pred_check_branch
          %164 = sbr.rel (%p162) target = $region16
        $region15: #{tpu_custom_call.1} parent=11 // pred_region
          %s166 = ssub.s32 16, 16
          %167 = vsyncadd [#allocation6], %s166
          %s168 = smul.addr %s29, 16
          %s169 = scalar_lea.hbm %s2, %s168
          %s171 = sshll.u32 [#allocation7], 4
          %s172 = int_to_ptr.vmem [resolvable:$true] %s171
          %174 = dma.hbm_to_vmem [thread:$0]  %s169, 16, %s172, [#allocation6]
        $region16: #{tpu_custom_call.1} parent=11 // pred_fallthru
          _
      $region12: #{tpu_custom_call.1} parent=5 // pred_fallthru
        _
      %p175 = scmp.lt.s32.totalorder %s18, 8
      // Predicated region
      $region17: #{tpu_custom_call.1} parent=5 // pred_check
        %p176 = pneg %p175
      $region18: #{tpu_custom_call.1} parent=5 // pred_check_branch
        %178 = sbr.rel (%p176) target = $region20
      $region19: #{tpu_custom_call.1} parent=5 // pred_region
        // Predicated region
        $region21: #{tpu_custom_call.1} parent=19 // pred_check
          %p179 = pneg %p59
        $region22: #{tpu_custom_call.1} parent=19 // pred_check_branch
          %181 = sbr.rel (%p179) target = $region24
        $region23: #{tpu_custom_call.1} parent=19 // pred_region
          %s182 = sand.u32 %s49, 1
          %s183 = scalar_lea.sflag [#allocation3], %s182
          %s184 = sand.u32 %s49, 1
          %s185 = smul.addr %s184, 16
          %s186 = scalar_lea.vmem [#allocation2], %s185
          %s187 = smul.u32 2, %s27
          %s189 = ssub.s32 256, 256
          %190 = vsyncadd %s183, %s189
          %s191 = smul.addr %s25, 8
          %s192 = sadd.s32 %s187, %s191
          %s193 = smul.addr %s192, 128
          %s194 = scalar_lea.hbm %s0, %s193
          %s196 = sshll.u32 %s186, 4
          %s197 = int_to_ptr.vmem [resolvable:$true] %s196
          %199 = dma.hbm_to_vmem [thread:$0]  %s194, 256, %s197, %s183
        $region24: #{tpu_custom_call.1} parent=19 // pred_fallthru
          _
        // Predicated region
        $region25: #{tpu_custom_call.1} parent=19 // pred_check
          %p200 = pneg %p87
        $region26: #{tpu_custom_call.1} parent=19 // pred_check_branch
          %202 = sbr.rel (%p200) target = $region28
        $region27: #{tpu_custom_call.1} parent=19 // pred_region
          %s203 = sand.u32 %s18, 1
          %s204 = scalar_lea.sflag [#allocation6], %s203
          %s205 = sand.u32 %s77, 1
          %s206 = smul.addr %s205, 256
          %s207 = scalar_lea.vmem [#allocation5], %s206
          %s208 = smul.u32 32, %s27
          %s210 = ssub.s32 4096, 4096
          %211 = vsyncadd %s204, %s210
          %s212 = sadd.s32 %s26, %s208
          %s213 = smul.addr %s212, 128
          %s214 = scalar_lea.hbm %s1, %s213
          %s215 = sshll.u32 %s207, 4
          %s216 = int_to_ptr.vmem [resolvable:$true] %s215
          %221 = dma.hbm_to_vmem [thread:$0]  %s214, 4096, %s216, %s204, 128, 128, 8
        $region28: #{tpu_custom_call.1} parent=19 // pred_fallthru
          _
      $region20: #{tpu_custom_call.1} parent=5 // pred_fallthru
        _
      %p222 = scmp.le.s32.totalorder 1, %s18
      %p223 = scmp.lt.s32.totalorder %s18, 9
      %p224 = pnand %p222, %p223
      %p225 = pneg %p224
      // Predicated region
      $region29: #{tpu_custom_call.1} parent=5 // pred_check
        _
      $region30: #{tpu_custom_call.1} parent=5 // pred_check_branch
        %227 = sbr.rel (%p224) target = $region32
      $region31: #{tpu_custom_call.1} parent=5 // pred_region
        %s228 = ssub.s32 %s18, 1
        %s229 = sand.u32 %s52, 1
        %s230 = scalar_lea.sflag [#allocation3], %s229
        %s231 = sand.u32 %s52, 1
        %s232 = smul.addr %s231, 16
        %s233 = scalar_lea.vmem [#allocation2], %s232
        // Predicated region
        $region33: #{tpu_custom_call.1} parent=31 // pred_check
          %p234 = pneg %p65
        $region34: #{tpu_custom_call.1} parent=31 // pred_check_branch
          %236 = sbr.rel (%p234) target = $region36
        $region35: #{tpu_custom_call.1} parent=31 // pred_region
          %237 = dma.done %s230, 256
        $region36: #{tpu_custom_call.1} parent=31 // pred_fallthru
          _
        %s238 = sand.u32 %s23, 1
        %s239 = scalar_lea.sflag [#allocation6], %s238
        %s240 = sand.u32 %s80, 1
        %s241 = smul.addr %s240, 256
        %s242 = scalar_lea.vmem [#allocation5], %s241
        // Predicated region
        $region37: #{tpu_custom_call.1} parent=31 // pred_check
          %p243 = pneg %p93
        $region38: #{tpu_custom_call.1} parent=31 // pred_check_branch
          %245 = sbr.rel (%p243) target = $region40
        $region39: #{tpu_custom_call.1} parent=31 // pred_region
          %246 = dma.done %s239, 4096
        $region40: #{tpu_custom_call.1} parent=31 // pred_fallthru
          _
        // Predicated region
        $region41: #{tpu_custom_call.1} parent=31 // pred_check
          %p247 = pneg %p119
        $region42: #{tpu_custom_call.1} parent=31 // pred_check_branch
          %249 = sbr.rel (%p247) target = $region44
        $region43: #{tpu_custom_call.1} parent=31 // pred_region
          %250 = dma.done [#allocation6], 16
        $region44: #{tpu_custom_call.1} parent=31 // pred_fallthru
          _
        %s251 = sand.u32 %s52, 1
        %s252 = scalar_lea.sflag [#allocation3], %s251
        %s253 = sand.u32 %s52, 1
        %s254 = smul.addr %s253, 16
        %s255 = scalar_lea.vmem [#allocation2], %s254
        %p256 = pneg %p65
        %p257 = pneg %p62
        %s258 = sand.u32 %s23, 1
        %s259 = scalar_lea.sflag [#allocation6], %s258
        %s260 = sand.u32 %s80, 1
        %s261 = smul.addr %s260, 256
        %s262 = scalar_lea.vmem [#allocation5], %s261
        %p263 = pneg %p93
        %p264 = pneg %p90
        %p265 = pneg %p119
        %p266 = pneg %p116
        %p267 = pneg %p147
        %p268 = pneg %p144
        %s269 = sand.u32 %s134, 1
        %s270 = scalar_lea.sflag [#allocation4], %s269
        %s271 = sand.u32 %s134, 1
        %s272 = smul.addr %s271, 8
        %s273 = scalar_lea.vmem [#allocation8], %s272
        %s274 = smul.u32 2, %s30
        %s275 = smul.u32 32, %s30
        %p276 = scmp.eq.s32.totalorder %s30, 0
        // Predicated region
        $region45: #{tpu_custom_call.1} parent=31 // pred_check
          %p277 = pneg %p276
        $region46: #{tpu_custom_call.1} parent=31 // pred_check_branch
          %279 = sbr.rel (%p277) target = $region48
        $region47: #{tpu_custom_call.1} parent=31 // pred_region
          %v280 = vld [vmem:[#allocation7] sm:$0x1]
          %v282 = vlaneseq
          %v283 = vshrl.u32 %v282, 7
          %v284 = vsub.s32 0, %v283
          %v285 = vrot.slane %v280, %v284
          %287 = vst [vmem:[%s273] sm:$0xff] %v285
        $region48: #{tpu_custom_call.1} parent=31 // pred_fallthru
          _
        %v288 = vld [vmem:[%s273] sm:$0xff]
        %v289 = vld [vmem:[%s233] sm:$0xff]
        %v290 = vld [vmem:[%s233 + $0x8] sm:$0xff]
        %v291 = vld [vmem:[%s242] sm:$0xff]
        %v292 = vld [vmem:[%s242 + $0x8] sm:$0xff]
        %v293 = vld [vmem:[%s242 + $0x10] sm:$0xff]
        %v294 = vld [vmem:[%s242 + $0x18] sm:$0xff]
        %v295 = vld [vmem:[%s242 + $0x20] sm:$0xff]
        %v296 = vld [vmem:[%s242 + $0x28] sm:$0xff]
        %v297 = vld [vmem:[%s242 + $0x30] sm:$0xff]
        %v298 = vld [vmem:[%s242 + $0x38] sm:$0xff]
        %v299 = vld [vmem:[%s242 + $0x40] sm:$0xff]
        %v300 = vld [vmem:[%s242 + $0x48] sm:$0xff]
        %v301 = vld [vmem:[%s242 + $0x50] sm:$0xff]
        %v302 = vld [vmem:[%s242 + $0x58] sm:$0xff]
        %v303 = vld [vmem:[%s242 + $0x60] sm:$0xff]
        %v304 = vld [vmem:[%s242 + $0x68] sm:$0xff]
        %v305 = vld [vmem:[%s242 + $0x70] sm:$0xff]
        %v306 = vld [vmem:[%s242 + $0x78] sm:$0xff]
        %v307 = vld [vmem:[%s242 + $0x80] sm:$0xff]
        %v308 = vld [vmem:[%s242 + $0x88] sm:$0xff]
        %v309 = vld [vmem:[%s242 + $0x90] sm:$0xff]
        %v310 = vld [vmem:[%s242 + $0x98] sm:$0xff]
        %v311 = vld [vmem:[%s242 + $0xa0] sm:$0xff]
        %v312 = vld [vmem:[%s242 + $0xa8] sm:$0xff]
        %v313 = vld [vmem:[%s242 + $0xb0] sm:$0xff]
        %v314 = vld [vmem:[%s242 + $0xb8] sm:$0xff]
        %v315 = vld [vmem:[%s242 + $0xc0] sm:$0xff]
        %v316 = vld [vmem:[%s242 + $0xc8] sm:$0xff]
        %v317 = vld [vmem:[%s242 + $0xd0] sm:$0xff]
        %v318 = vld [vmem:[%s242 + $0xd8] sm:$0xff]
        %v319 = vld [vmem:[%s242 + $0xe0] sm:$0xff]
        %v320 = vld [vmem:[%s242 + $0xe8] sm:$0xff]
        %v321 = vld [vmem:[%s242 + $0xf0] sm:$0xff]
        %v322 = vld [vmem:[%s242 + $0xf8] sm:$0xff]
        %323 = vmatprep.subr.mxu0 0.0
        %324 = vmatpush1.msra.mxu0 %v291
        %325 = vmatprep.subr.mxu0 0.0
        %326 = vmatpush1.msra.mxu0 %v292
        %327 = vmatprep.subr.mxu0 0.0
        %328 = vmatpush1.msra.mxu0 %v293
        %329 = vmatprep.subr.mxu0 0.0
        %330 = vmatpush1.msra.mxu0 %v294
        %331 = vmatprep.subr.mxu0 0.0
        %332 = vmatpush1.msra.mxu0 %v295
        %333 = vmatprep.subr.mxu0 0.0
        %334 = vmatpush1.msra.mxu0 %v296
        %335 = vmatprep.subr.mxu0 0.0
        %336 = vmatpush1.msra.mxu0 %v297
        %337 = vmatprep.subr.mxu0 0.0
        %338 = vmatpush1.msra.mxu0 %v298
        %339 = vmatprep.subr.mxu0 0.0
        %340 = vmatpush1.msra.mxu0 %v299
        %341 = vmatprep.subr.mxu0 0.0
        %342 = vmatpush1.msra.mxu0 %v300
        %343 = vmatprep.subr.mxu0 0.0
        %344 = vmatpush1.msra.mxu0 %v301
        %345 = vmatprep.subr.mxu0 0.0
        %346 = vmatpush1.msra.mxu0 %v302
        %347 = vmatprep.subr.mxu0 0.0
        %348 = vmatpush1.msra.mxu0 %v303
        %349 = vmatprep.subr.mxu0 0.0
        %350 = vmatpush1.msra.mxu0 %v304
        %351 = vmatprep.subr.mxu0 0.0
        %352 = vmatpush1.msra.mxu0 %v305
        %353 = vmatprep.subr.mxu0 0.0
        %354 = vmatpush1.msra.mxu0 %v306
        %355 = vmatprep.subr.mxu0 0.0
        %356 = vmatpush1.msra.mxu0 %v307
        %357 = vmatprep.subr.mxu0 0.0
        %358 = vmatpush1.msra.mxu0 %v308
        %359 = vmatprep.subr.mxu0 0.0
        %360 = vmatpush1.msra.mxu0 %v309
        %361 = vmatprep.subr.mxu0 0.0
        %362 = vmatpush1.msra.mxu0 %v310
        %363 = vmatprep.subr.mxu0 0.0
        %364 = vmatpush1.msra.mxu0 %v311
        %365 = vmatprep.subr.mxu0 0.0
        %366 = vmatpush1.msra.mxu0 %v312
        %367 = vmatprep.subr.mxu0 0.0
        %368 = vmatpush1.msra.mxu0 %v313
        %369 = vmatprep.subr.mxu0 0.0
        %370 = vmatpush1.msra.mxu0 %v314
        %371 = vmatprep.subr.mxu0 0.0
        %372 = vmatpush1.msra.mxu0 %v315
        %373 = vmatprep.subr.mxu0 0.0
        %374 = vmatpush1.msra.mxu0 %v316
        %375 = vmatprep.subr.mxu0 0.0
        %376 = vmatpush1.msra.mxu0 %v317
        %377 = vmatprep.subr.mxu0 0.0
        %378 = vmatpush1.msra.mxu0 %v318
        %379 = vmatprep.subr.mxu0 0.0
        %380 = vmatpush1.msra.mxu0 %v319
        %381 = vmatprep.subr.mxu0 0.0
        %382 = vmatpush1.msra.mxu0 %v320
        %383 = vmatprep.subr.mxu0 0.0
        %384 = vmatpush1.msra.mxu0 %v321
        %385 = vmatprep.subr.mxu0 0.0
        %386 = vmatpush1.msra.mxu0 %v322
        %387 = vmatprep.mubr.f32.mxu0 %v290
        %388 = vmatmul.mubr.f32.gmra.mrb[0].mxu0 %v289
        %v389 = vpop.f32.mrb[0].mxu0
        %v390 = vadd.f32 0.0, %v389
        %v391 = vpop.f32.mrb[0].mxu0
        %392 = vdwg.mxu0
        %v393 = vadd.f32 %v288, %v390
        %394 = vst [vmem:[%s273] sm:$0xff] %v393
        %s395 = sand.u32 %s134, 1
        %s396 = scalar_lea.sflag [#allocation4], %s395
        %s397 = sand.u32 %s134, 1
        %s398 = smul.addr %s397, 8
        %s399 = scalar_lea.vmem [#allocation8], %s398
        // Predicated region
        $region49: #{tpu_custom_call.1} parent=31 // pred_check
          %p400 = pneg %p144
        $region50: #{tpu_custom_call.1} parent=31 // pred_check_branch
          %402 = sbr.rel (%p400) target = $region52
        $region51: #{tpu_custom_call.1} parent=31 // pred_region
          %s404 = ssub.s32 128, 128
          %405 = vsyncadd %s396, %s404
          %s406 = sadd.s32 %s29, %s28
          %s407 = smul.addr %s406, 128
          %s408 = scalar_lea.hbm %s3, %s407
          %s410 = sshll.u32 %s399, 4
          %s411 = int_to_ptr.vmem [resolvable:$true] %s410
          %413 = dma.vmem_to_hbm [thread:$0]  %s411, 128, %s408, %s396
        $region52: #{tpu_custom_call.1} parent=31 // pred_fallthru
          _
      $region32: #{tpu_custom_call.1} parent=5 // pred_fallthru
        _
      %p414 = scmp.le.s32.totalorder 2, %s18
      // Predicated region
      $region53: #{tpu_custom_call.1} parent=5 // pred_check
        %p415 = pneg %p414
      $region54: #{tpu_custom_call.1} parent=5 // pred_check_branch
        %417 = sbr.rel (%p415) target = $region56
      $region55: #{tpu_custom_call.1} parent=5 // pred_region
        %s418 = ssub.s32 %s18, 2
        // Predicated region
        $region57: #{tpu_custom_call.1} parent=55 // pred_check
          %p419 = pneg %p150
        $region58: #{tpu_custom_call.1} parent=55 // pred_check_branch
          %421 = sbr.rel (%p419) target = $region60
        $region59: #{tpu_custom_call.1} parent=55 // pred_region
          %s422 = sand.u32 %s135, 1
          %s423 = scalar_lea.sflag [#allocation4], %s422
          %s424 = sand.u32 %s135, 1
          %s425 = smul.addr %s424, 8
          %s426 = scalar_lea.vmem [#allocation8], %s425
          %427 = dma.done %s423, 128
        $region60: #{tpu_custom_call.1} parent=55 // pred_fallthru
          _
      $region56: #{tpu_custom_call.1} parent=5 // pred_fallthru
        _
    $region6: #{tpu_custom_call.1} parent=1 // loop_footer
      %s22 = sadd.s32 1, %s18
    $region7: #{tpu_custom_call.1} parent=1 // loop_footer_branch
      %17 = sbr.rel target = $region3
    $region8: #{tpu_custom_call.1} parent=1 // loop_exit
      _
    %428 = vsyncpa [#allocation3], 1
    %s429 = scalar_lea.sflag [#allocation3], 1
    %430 = vsyncpa %s429, 1
    %431 = vsyncpa [#allocation6], 1
    %s432 = scalar_lea.sflag [#allocation6], 1
    %433 = vsyncpa %s432, 1
    %434 = vsyncpa [#allocation4], 1
    %s435 = scalar_lea.sflag [#allocation4], 1
    %436 = vsyncpa %s435, 1

</llo_original>
